<compile_context>
chip_gen: v5e
topology: v5e:2x2
jax: 0.10.0
libtpu: 0.0.40
codegen_flags: <defaults>
</compile_context>

<pallas_src>
import numpy as np
import jax
import jax.numpy as jnp
from jax.experimental import pallas as pl
from jax.experimental.pallas import tpu as pltpu


# ----------------------------- Pallas kernel -------------------------------

def _avg_pool3d_kernel(x_ref, m_ref, o_ref, acc_ref):
    # x_ref: (cb, kblk)   m_ref: (kblk, npad)   o_ref: (cb, npad)   acc: f32
    k = pl.program_id(1)

    @pl.when(k == 0)
    def _():
        acc_ref[...] = jnp.zeros_like(acc_ref)

    acc_ref[...] += jnp.dot(x_ref[...], m_ref[...],
                            preferred_element_type=jnp.float32)

    @pl.when(k == pl.num_programs(1) - 1)
    def _():
        o_ref[...] = acc_ref[...].astype(o_ref.dtype)


# ------------------------------- helpers ------------------------------------

def _pool_matrix(T, H, W):
    """(T*H*W, npad) window-coverage matrix; rows follow t*H*W + h*W + w."""
    kh, kw = min(H, 7), min(W, 7)
    Ho, Wo = H - kh + 1, W - kw + 1
    ph = np.zeros((H, Ho), np.float32)
    for o in range(Ho):
        ph[o:o + kh, o] = 1.0
    pw = np.zeros((W, Wo), np.float32)
    for o in range(Wo):
        pw[o:o + kw, o] = 1.0
    msp = np.kron(ph, pw) / float(T * kh * kw)         # (H*W, Ho*Wo)
    nout = Ho * Wo
    npad = max(128, -(-nout // 128) * 128)              # lane pad -> unmasked vst
    m = np.zeros((T * H * W, npad), np.float32)
    m[:, :nout] = np.tile(msp, (T, 1))                  # fold T into the K axis
    return m, Ho, Wo, nout, npad


def _vmem_capacity_bytes():
    try:
        info = pltpu.get_tpu_info()
        for attr in ("vmem_capacity_bytes", "vmem_bytes", "vmem_size_bytes"):
            v = getattr(info, attr, None)
            if v:
                return int(v)
    except Exception:
        pass
    return 64 << 20                                     # conservative (v7x)


def _choose_tiles(M, K, itemsize, budget):
    """Row tile (matmul M) and K chunk for the x block, VMEM-budget aware."""
    sub = 8 if itemsize >= 4 else 32 // itemsize        # sublane granule per dtype
    if M <= sub:
        cb = M
    else:
        cb = min(512, (M // sub) * sub)
        if M >= 2 * sub:                                # >=2 parallel blocks (v7x 2 TCs)
            cb = min(cb, max(sub, (M // 2) // sub * sub))
        by_budget = (budget // max(K * itemsize, 1)) // sub * sub
        if by_budget >= sub:
            cb = min(cb, by_budget)
        cb = max(cb, sub)
    kblk = K                                            # full K unless block too big
    while cb * kblk * itemsize > budget and kblk % 256 == 0:
        kblk //= 2                                      # stays a 128-multiple divisor of K
    return cb, kblk


# ------------------------------- forward ------------------------------------

def custom_avg_pool3d(x):
    """x: (B, C, T, H, W), NCTHW exactly like the PyTorch module."""
    B, C, T, H, W = x.shape
    m_np, Ho, Wo, nout, npad = _pool_matrix(T, H, W)

    M, K = B * C, T * H * W
    x2 = x.reshape(M, K)                                # free contiguous reshape
    msp = jnp.asarray(m_np, dtype=x.dtype)              # bf16 in -> bf16 weights

    itemsize = jnp.dtype(x.dtype).itemsize
    vmem_cap = _vmem_capacity_bytes()
    budget = int(min(max(vmem_cap // 10, 2 << 20), 12 << 20))
    cb, kblk = _choose_tiles(M, K, itemsize, budget)
    nm, nk = pl.cdiv(M, cb), K // kblk

    # Scoped-VMEM limit covering double-buffered x/Msp/out blocks + f32 acc.
    needed = (2 * cb * kblk * itemsize + 2 * kblk * npad * itemsize
              + 2 * cb * npad * itemsize + 4 * cb * npad + (2 << 20))
    vmem_limit = int(min(max(needed, 24 << 20), vmem_cap))

    out = pl.pallas_call(
        _avg_pool3d_kernel,
        out_shape=jax.ShapeDtypeStruct((M, npad), x.dtype),
        grid=(nm, nk),
        in_specs=[
            pl.BlockSpec((cb, kblk), lambda i, k: (i, k)),
            pl.BlockSpec((kblk, npad), lambda i, k: (k, 0)),
        ],
        out_specs=pl.BlockSpec((cb, npad), lambda i, k: (i, 0)),
        scratch_shapes=[pltpu.VMEM((cb, npad), jnp.float32)],
        compiler_params=pltpu.CompilerParams(
            dimension_semantics=("parallel", "arbitrary"),
            vmem_limit_bytes=vmem_limit),
    )(x2, msp)

    # Spec-mandated output shape; the slice is identity when nout == npad.
    return out[:, :nout].reshape(B, C, 1, Ho, Wo)


# --------------------------------- driver ------------------------------------

if __name__ == "__main__":
    key = jax.random.PRNGKey(0)
    B, C, T, H, W = 2, 32, 8, 16, 16
    x = jax.random.normal(key, (B, C, T, H, W), dtype=jnp.float32)

    out = jax.jit(custom_avg_pool3d)(x)
    jax.block_until_ready(out)

    # reference: F.avg_pool3d(kernel=(T, min(H,7), min(W,7)), stride=1, pad=0)
    kh, kw = min(H, 7), min(W, 7)
    ref = jax.lax.reduce_window(
        x, 0.0, jax.lax.add,
        window_dimensions=(1, 1, T, kh, kw),
        window_strides=(1, 1, 1, 1, 1),
        padding="VALID") / float(T * kh * kw)

    assert out.shape == (B, C, 1, H - kh + 1, W - kw + 1), out.shape
    assert out.shape == ref.shape
    max_err = float(jnp.max(jnp.abs(out - ref)))
    assert max_err < 2e-4, f"max abs err {max_err}"
    assert bool(jnp.all(jnp.isfinite(out)))
    print("KERNEL_OK")
</pallas_src>

<mosaic_0001>
module attributes {stable_mosaic.version = 11 : i64} {
  func.func @_avg_pool3d_kernel(%arg0: i32, %arg1: i32, %arg2: memref<32x2048xf32, #tpu.memory_space<vmem>>, %arg3: memref<2048x128xf32, #tpu.memory_space<vmem>>, %arg4: memref<32x128xf32, #tpu.memory_space<vmem>>, %arg5: memref<32x128xf32, #tpu.memory_space<vmem>>) attributes {dimension_semantics = [#tpu.dimension_semantics<parallel>, #tpu.dimension_semantics<arbitrary>], iteration_bounds = array<i64: 2, 1>, scalar_prefetch = 0 : i64, scratch_operands = 1 : i64, tpu.core_type = #tpu.core_type<tc>, window_params = [{transform_indices = @transform_0, window_bounds = array<i64: 32, 2048>}, {transform_indices = @transform_1, window_bounds = array<i64: 2048, 128>}, {transform_indices = @transform_2, window_bounds = array<i64: 32, 128>}]} {
    %c0_i32 = arith.constant 0 : i32
    %0 = arith.cmpi eq, %arg1, %c0_i32 : i32
    %1 = arith.extui %0 : i1 to i32
    %c0_i32_0 = arith.constant 0 : i32
    %2 = arith.cmpi ne, %1, %c0_i32_0 : i32
    scf.if %2 {
      %cst_10 = arith.constant 0.000000e+00 : f32
      %12 = vector.broadcast %cst_10 : f32 to vector<32x128xf32>
      %c0_11 = arith.constant 0 : index
      %c0_12 = arith.constant 0 : index
      %13 = vector.load %arg5[%c0_11, %c0_12] : memref<32x128xf32, #tpu.memory_space<vmem>>, vector<32x128xf32>
      tpu.vector_store %arg5[%c0_11, %c0_12], %12 {strides = array<i32>} : memref<32x128xf32, #tpu.memory_space<vmem>>, vector<32x128xf32>,
    } else {
    }
    %c0 = arith.constant 0 : index
    %c0_1 = arith.constant 0 : index
    %3 = vector.load %arg5[%c0, %c0_1] : memref<32x128xf32, #tpu.memory_space<vmem>>, vector<32x128xf32>
    %c0_2 = arith.constant 0 : index
    %c0_3 = arith.constant 0 : index
    %4 = vector.load %arg2[%c0_2, %c0_3] : memref<32x2048xf32, #tpu.memory_space<vmem>>, vector<32x2048xf32>
    %c0_4 = arith.constant 0 : index
    %c0_5 = arith.constant 0 : index
    %5 = vector.load %arg3[%c0_4, %c0_5] : memref<2048x128xf32, #tpu.memory_space<vmem>>, vector<2048x128xf32>
    %cst = arith.constant dense<0.000000e+00> : vector<32x128xf32>
    %6 = tpu.matmul %4, %5, %cst {dimension_numbers = #tpu.dot_dimension_numbers<[1], [0], [0], [1], [0, 0, 1, 1], [], []>} : vector<32x2048xf32>, vector<2048x128xf32>, vector<32x128xf32> -> vector<32x128xf32>
    %7 = arith.addf %3, %6 : vector<32x128xf32>
    %c0_6 = arith.constant 0 : index
    %c0_7 = arith.constant 0 : index
    %8 = vector.load %arg5[%c0_6, %c0_7] : memref<32x128xf32, #tpu.memory_space<vmem>>, vector<32x128xf32>
    tpu.vector_store %arg5[%c0_6, %c0_7], %7 {strides = array<i32>} : memref<32x128xf32, #tpu.memory_space<vmem>>, vector<32x128xf32>,
    %c0_i32_8 = arith.constant 0 : i32
    %9 = arith.cmpi eq, %arg1, %c0_i32_8 : i32
    %10 = arith.extui %9 : i1 to i32
    %c0_i32_9 = arith.constant 0 : i32
    %11 = arith.cmpi ne, %10, %c0_i32_9 : i32
    scf.if %11 {
      %c0_10 = arith.constant 0 : index
      %c0_11 = arith.constant 0 : index
      %12 = vector.load %arg5[%c0_10, %c0_11] : memref<32x128xf32, #tpu.memory_space<vmem>>, vector<32x128xf32>
      %c0_12 = arith.constant 0 : index
      %c0_13 = arith.constant 0 : index
      %13 = vector.load %arg4[%c0_12, %c0_13] : memref<32x128xf32, #tpu.memory_space<vmem>>, vector<32x128xf32>
      tpu.vector_store %arg4[%c0_12, %c0_13], %12 {strides = array<i32>} : memref<32x128xf32, #tpu.memory_space<vmem>>, vector<32x128xf32>,
    } else {
    }
    return
  }
  func.func @transform_0(%arg0: i32, %arg1: i32) -> (i32, i32) {
    %c0_i32 = arith.constant 0 : i32
    return %arg0, %arg1 : i32, i32
  }
  func.func @transform_1(%arg0: i32, %arg1: i32) -> (i32, i32) {
    %c0_i32 = arith.constant 0 : i32
    %c0_i32_0 = arith.constant 0 : i32
    return %arg1, %c0_i32 : i32, i32
  }
  func.func @transform_2(%arg0: i32, %arg1: i32) -> (i32, i32) {
    %c0_i32 = arith.constant 0 : i32
    %c0_i32_0 = arith.constant 0 : i32
    return %arg0, %c0_i32 : i32, i32
  }
}

</mosaic_0001>

<llo_original>
// kernel: custom_avg_pool3d.1
$region0: #{custom_avg_pool3d.1}
  #allocation0 [shape = 'u32[]', space=smem, size = 0x4, offset = 0x4, fixed_abs, tag = 'smem constant byte address 0x4 - core index']
  #allocation1 [shape = 'u32[72,128]{1,0:T(1,128)}', space=vmem, size = 0x9000, scoped, tag = 'internal scratch']
  #allocation2 [shape = 'f32[32,128]{1,0:T(8,128)}', space=vmem, size = 0x4000, scoped, tag = 'scratch operand']
  %s0 = inlined_call_operand.vmem [shape: f32[64,2048], index: 0, kind: input, shape index: {}]
  %s1 = inlined_call_operand.vmem [shape: f32[2048,128], index: 1, kind: input, shape index: {}]
  %s2 = inlined_call_operand.vmem [shape: f32[64,128], index: 2, kind: output, shape index: {}]
  %s3 = sld [smem:[#allocation0]]
  $region49: #{custom_avg_pool3d.1} parent=0
    _
  %s5 = ssub.s32 1, %s3
  %s6 = scalar_select 0, %s5, %s3
  loop: start=0, step=1, limit=4
  $region2: #{custom_avg_pool3d.1} parent=0 // loop_pre_header
    _
  $region3: #{custom_avg_pool3d.1} parent=0 // loop_header
    %s8 = sphi 0, %s12
    %p9 = scmp.ge.s32.totalorder %s8, 4
    %s15 = sphi 0, %s27
    %s16 = sphi 0, %s23
    %s17 = sphi 0, %s15
    %s18 = sphi 0, %s16
    %s19 = sphi 0, %s17
    %s20 = sphi 0, %s18
    %s32 = sphi 0, %s34
    %s35 = sphi 0, %s32
    %s36 = sphi 0, %s35
    %s52 = sphi 0, %s36
    %s58 = sphi 0, %s60
    %s61 = sphi 0, %s58
    %s62 = sphi 0, %s61
    %s78 = sphi 0, %s62
    %s84 = sphi 0, %s86
    %s87 = sphi 0, %s84
    %s88 = sphi 0, %s87
    %s104 = sphi 0, %s88
  $region4: #{custom_avg_pool3d.1} parent=0 // loop_header_branch
    %11 = sbr.rel (%p9) target = $region8
  $region5: #{custom_avg_pool3d.1} parent=0 // loop_body
    %s13 = ssub.s32 %s8, 1
    %s14 = ssub.s32 %s8, 2
    %s21 = sadd.s32 1, %s16
    %p22 = scmp.ge.s32.totalorder %s21, 1
    %s23 = scalar_select %p22, 0, %s21
    %s24 = sadd.s32 1, %s15
    %s25 = scalar_select %p22, %s24, %s15
    %p26 = scmp.ge.s32.totalorder %s25, 2
    %s27 = scalar_select %p26, 0, %s25
    %s28 = ssub.s32 %s15, %s27
    %s29 = ssub.s32 %s16, %s23
    %s30 = sor.u32 %s28, %s29
    %p31 = scmp.eq.s32.totalorder %s30, 0
    %s33 = sadd.s32 %s32, 1
    %s34 = scalar_select %p31, %s32, %s33
    %p37 = pneg %p31
    %p38 = scmp.eq.s32.totalorder %s8, 1
    %p39 = por %p37, %p38
    %p40 = scmp.ne.s32.totalorder %s32, %s35
    %p41 = scmp.eq.s32.totalorder %s8, 0
    %p42 = por %p40, %p41
    %p43 = scmp.ne.s32.totalorder %s32, %s35
    %p44 = scmp.eq.s32.totalorder %s13, 1
    %p45 = por %p43, %p44
    %p46 = scmp.ne.s32.totalorder %s35, %s36
    %p47 = scmp.eq.s32.totalorder %s13, 0
    %p48 = por %p46, %p47
    %p49 = scmp.ne.s32.totalorder %s35, %s36
    %p50 = scmp.eq.s32.totalorder %s14, 1
    %p51 = por %p49, %p50
    %p53 = scmp.ne.s32.totalorder %s36, %s52
    %p54 = scmp.eq.s32.totalorder %s14, 0
    %p55 = por %p53, %p54
    %s56 = ssub.s32 %s16, %s23
    %p57 = scmp.eq.s32.totalorder %s56, 0
    %s59 = sadd.s32 %s58, 1
    %s60 = scalar_select %p57, %s58, %s59
    %p63 = pneg %p57
    %p64 = scmp.eq.s32.totalorder %s8, 1
    %p65 = por %p63, %p64
    %p66 = scmp.ne.s32.totalorder %s58, %s61
    %p67 = scmp.eq.s32.totalorder %s8, 0
    %p68 = por %p66, %p67
    %p69 = scmp.ne.s32.totalorder %s58, %s61
    %p70 = scmp.eq.s32.totalorder %s13, 1
    %p71 = por %p69, %p70
    %p72 = scmp.ne.s32.totalorder %s61, %s62
    %p73 = scmp.eq.s32.totalorder %s13, 0
    %p74 = por %p72, %p73
    %p75 = scmp.ne.s32.totalorder %s61, %s62
    %p76 = scmp.eq.s32.totalorder %s14, 1
    %p77 = por %p75, %p76
    %p79 = scmp.ne.s32.totalorder %s62, %s78
    %p80 = scmp.eq.s32.totalorder %s14, 0
    %p81 = por %p79, %p80
    %s82 = ssub.s32 %s15, %s27
    %p83 = scmp.eq.s32.totalorder %s82, 0
    %s85 = sadd.s32 %s84, 1
    %s86 = scalar_select %p83, %s84, %s85
    %p89 = pneg %p83
    %p90 = scmp.eq.s32.totalorder %s8, 1
    %p91 = por %p89, %p90
    %p92 = scmp.ne.s32.totalorder %s84, %s87
    %p93 = scmp.eq.s32.totalorder %s8, 0
    %p94 = por %p92, %p93
    %p95 = scmp.ne.s32.totalorder %s84, %s87
    %p96 = scmp.eq.s32.totalorder %s13, 1
    %p97 = por %p95, %p96
    %p98 = scmp.ne.s32.totalorder %s87, %s88
    %p99 = scmp.eq.s32.totalorder %s13, 0
    %p100 = por %p98, %p99
    %p101 = scmp.ne.s32.totalorder %s87, %s88
    %p102 = scmp.eq.s32.totalorder %s14, 1
    %p103 = por %p101, %p102
    %p105 = scmp.ne.s32.totalorder %s88, %s104
    %p106 = scmp.eq.s32.totalorder %s14, 0
    %p107 = por %p105, %p106
    %p108 = scmp.le.s32.totalorder 1, %s8
    %p109 = scmp.lt.s32.totalorder %s8, 3
    %p110 = pnand %p108, %p109
    %p111 = pneg %p110
    // Predicated region
    $region9: #{custom_avg_pool3d.1} parent=5 // pred_check
      _
    $region10: #{custom_avg_pool3d.1} parent=5 // pred_check_branch
      %113 = sbr.rel (%p110) target = $region12
    $region11: #{custom_avg_pool3d.1} parent=5 // pred_region
      %s114 = ssub.s32 %s8, 1
      // Predicated region
      $region13: #{custom_avg_pool3d.1} parent=11 // pred_check
        %p115 = pneg %p74
      $region14: #{custom_avg_pool3d.1} parent=11 // pred_check_branch
        %117 = sbr.rel (%p115) target = $region16
      $region15: #{custom_avg_pool3d.1} parent=11 // pred_region
        %s118 = smul.u32 256, %s18
        %p119 = scmp.lt.s32.totalorder %s118, 255
        %s120 = scalar_select %p119, %s118, 255
        %s121 = smul.addr %s120, 8
        %s122 = scalar_lea.vmem %s1, %s121
        %s123 = smul.u32 256, %s18
      $region16: #{custom_avg_pool3d.1} parent=11 // pred_fallthru
        _
    $region12: #{custom_avg_pool3d.1} parent=5 // pred_fallthru
      _
    %p124 = scmp.lt.s32.totalorder %s8, 2
    // Predicated region
    $region17: #{custom_avg_pool3d.1} parent=5 // pred_check
      %p125 = pneg %p124
    $region18: #{custom_avg_pool3d.1} parent=5 // pred_check_branch
      %127 = sbr.rel (%p125) target = $region20
    $region19: #{custom_avg_pool3d.1} parent=5 // pred_region
      // Predicated region
      $region21: #{custom_avg_pool3d.1} parent=19 // pred_check
        %p128 = pneg %p42
      $region22: #{custom_avg_pool3d.1} parent=19 // pred_check_branch
        %130 = sbr.rel (%p128) target = $region24
      $region23: #{custom_avg_pool3d.1} parent=19 // pred_region
        %s131 = smul.u32 4, %s15
        %s132 = smul.u32 16, %s16
        %p133 = scmp.lt.s32.totalorder %s131, 7
        %s134 = scalar_select %p133, %s131, 7
        %p135 = scmp.lt.s32.totalorder %s132, 15
        %s136 = scalar_select %p135, %s132, 15
        %s137 = smul.addr %s134, 16
        %s138 = sadd.s32 %s136, %s137
        %s139 = smul.addr %s138, 8
        %s140 = scalar_lea.vmem %s0, %s139
        %s141 = smul.u32 4, %s15
        %s142 = smul.u32 16, %s16
      $region24: #{custom_avg_pool3d.1} parent=19 // pred_fallthru
        _
    $region20: #{custom_avg_pool3d.1} parent=5 // pred_fallthru
      _
    %p143 = scmp.le.s32.totalorder 1, %s8
    %p144 = scmp.lt.s32.totalorder %s8, 3
    %p145 = pnand %p143, %p144
    %p146 = pneg %p145
    // Predicated region
    $region25: #{custom_avg_pool3d.1} parent=5 // pred_check
      _
    $region26: #{custom_avg_pool3d.1} parent=5 // pred_check_branch
      %148 = sbr.rel (%p145) target = $region28
    $region27: #{custom_avg_pool3d.1} parent=5 // pred_region
      %s149 = ssub.s32 %s8, 1
      %s150 = smul.u32 4, %s17
      %s151 = smul.u32 16, %s18
      %p152 = scmp.lt.s32.totalorder %s150, 7
      %s153 = scalar_select %p152, %s150, 7
      %p154 = scmp.lt.s32.totalorder %s151, 15
      %s155 = scalar_select %p154, %s151, 15
      %s156 = smul.addr %s153, 16
      %s157 = sadd.s32 %s155, %s156
      %s158 = smul.addr %s157, 8
      %s159 = scalar_lea.vmem %s0, %s158
      %p160 = pneg %p48
      %p161 = pneg %p45
      %s162 = smul.u32 256, %s18
      %p163 = scmp.lt.s32.totalorder %s162, 255
      %s164 = scalar_select %p163, %s162, 255
      %s165 = smul.addr %s164, 8
      %s166 = scalar_lea.vmem %s1, %s165
      %p167 = pneg %p74
      %p168 = pneg %p71
      %p169 = pneg %p100
      %p170 = pneg %p97
      %s171 = smul.u32 4, %s17
      %p172 = scmp.lt.s32.totalorder %s171, 7
      %s173 = scalar_select %p172, %s171, 7
      %s174 = smul.addr %s173, 8
      %s175 = scalar_lea.vmem %s2, %s174
      %s176 = smul.u32 4, %s17
      %s177 = smul.u32 16, %s18
      %p178 = scmp.lt.s32.totalorder %s176, 7
      %s179 = scalar_select %p178, %s176, 7
      %p180 = scmp.lt.s32.totalorder %s177, 15
      %s181 = scalar_select %p180, %s177, 15
      %s182 = smul.addr %s179, 16
      %s183 = sadd.s32 %s181, %s182
      %s184 = smul.addr %s183, 8
      %s185 = scalar_lea.vmem %s0, %s184
      %s186 = smul.u32 4, %s17
      %s187 = smul.u32 16, %s18
      %s188 = smul.u32 256, %s18
      %p189 = scmp.lt.s32.totalorder %s188, 255
      %s190 = scalar_select %p189, %s188, 255
      %s191 = smul.addr %s190, 8
      %s192 = scalar_lea.vmem %s1, %s191
      %s193 = smul.u32 256, %s18
      %s194 = smul.u32 4, %s17
      %p195 = scmp.lt.s32.totalorder %s194, 7
      %s196 = scalar_select %p195, %s194, 7
      %s197 = smul.addr %s196, 8
      %s198 = scalar_lea.vmem %s2, %s197
      %s199 = smul.u32 4, %s17
      %p200 = scmp.eq.s32.totalorder %s18, 0
      // Predicated region
      $region29: #{custom_avg_pool3d.1} parent=27 // pred_check
        %p201 = pneg %p200
      $region30: #{custom_avg_pool3d.1} parent=27 // pred_check_branch
        %203 = sbr.rel (%p201) target = $region32
      $region31: #{custom_avg_pool3d.1} parent=27 // pred_region
        %204 = vst [vmem:[#allocation2] sm:$0xff] 0.0
        %205 = vst [vmem:[#allocation2 + $0x8] sm:$0xff] 0.0
        %206 = vst [vmem:[#allocation2 + $0x10] sm:$0xff] 0.0
        %207 = vst [vmem:[#allocation2 + $0x18] sm:$0xff] 0.0
      $region32: #{custom_avg_pool3d.1} parent=27 // pred_fallthru
        _
      %v208 = vld [vmem:[#allocation2] sm:$0xff]
      %v209 = vld [vmem:[#allocation2 + $0x8] sm:$0xff]
      %v210 = vld [vmem:[#allocation2 + $0x10] sm:$0xff]
      %v211 = vld [vmem:[#allocation2 + $0x18] sm:$0xff]
      %v212 = vld [vmem:[%s185] sm:$0xff]
      %v213 = vld [vmem:[%s185 + $0x8] sm:$0xff]
      %v214 = vld [vmem:[%s185 + $0x10] sm:$0xff]
      %v215 = vld [vmem:[%s185 + $0x18] sm:$0xff]
      %v216 = vld [vmem:[%s185 + $0x20] sm:$0xff]
      %v217 = vld [vmem:[%s185 + $0x28] sm:$0xff]
      %v218 = vld [vmem:[%s185 + $0x30] sm:$0xff]
      %v219 = vld [vmem:[%s185 + $0x38] sm:$0xff]
      %v220 = vld [vmem:[%s185 + $0x40] sm:$0xff]
      %v221 = vld [vmem:[%s185 + $0x48] sm:$0xff]
      %v222 = vld [vmem:[%s185 + $0x50] sm:$0xff]
      %v223 = vld [vmem:[%s185 + $0x58] sm:$0xff]
      %v224 = vld [vmem:[%s185 + $0x60] sm:$0xff]
      %v225 = vld [vmem:[%s185 + $0x68] sm:$0xff]
      %v226 = vld [vmem:[%s185 + $0x70] sm:$0xff]
      %v227 = vld [vmem:[%s185 + $0x78] sm:$0xff]
      %v228 = vld [vmem:[%s185 + $0x80] sm:$0xff]
      %v229 = vld [vmem:[%s185 + $0x88] sm:$0xff]
      %v230 = vld [vmem:[%s185 + $0x90] sm:$0xff]
      %v231 = vld [vmem:[%s185 + $0x98] sm:$0xff]
      %v232 = vld [vmem:[%s185 + $0xa0] sm:$0xff]
      %v233 = vld [vmem:[%s185 + $0xa8] sm:$0xff]
      %v234 = vld [vmem:[%s185 + $0xb0] sm:$0xff]
      %v235 = vld [vmem:[%s185 + $0xb8] sm:$0xff]
      %v236 = vld [vmem:[%s185 + $0xc0] sm:$0xff]
      %v237 = vld [vmem:[%s185 + $0xc8] sm:$0xff]
      %v238 = vld [vmem:[%s185 + $0xd0] sm:$0xff]
      %v239 = vld [vmem:[%s185 + $0xd8] sm:$0xff]
      %v240 = vld [vmem:[%s185 + $0xe0] sm:$0xff]
      %v241 = vld [vmem:[%s185 + $0xe8] sm:$0xff]
      %v242 = vld [vmem:[%s185 + $0xf0] sm:$0xff]
      %v243 = vld [vmem:[%s185 + $0xf8] sm:$0xff]
      %v244 = vld [vmem:[%s185 + $0x100] sm:$0xff]
      %v245 = vld [vmem:[%s185 + $0x108] sm:$0xff]
      %v246 = vld [vmem:[%s185 + $0x110] sm:$0xff]
      %v247 = vld [vmem:[%s185 + $0x118] sm:$0xff]
      %v248 = vld [vmem:[%s185 + $0x120] sm:$0xff]
      %v249 = vld [vmem:[%s185 + $0x128] sm:$0xff]
      %v250 = vld [vmem:[%s185 + $0x130] sm:$0xff]
      %v251 = vld [vmem:[%s185 + $0x138] sm:$0xff]
      %v252 = vld [vmem:[%s185 + $0x140] sm:$0xff]
      %v253 = vld [vmem:[%s185 + $0x148] sm:$0xff]
      %v254 = vld [vmem:[%s185 + $0x150] sm:$0xff]
      %v255 = vld [vmem:[%s185 + $0x158] sm:$0xff]
      %v256 = vld [vmem:[%s185 + $0x160] sm:$0xff]
      %v257 = vld [vmem:[%s185 + $0x168] sm:$0xff]
      %v258 = vld [vmem:[%s185 + $0x170] sm:$0xff]
      %v259 = vld [vmem:[%s185 + $0x178] sm:$0xff]
      %v260 = vld [vmem:[%s185 + $0x180] sm:$0xff]
      %v261 = vld [vmem:[%s185 + $0x188] sm:$0xff]
      %v262 = vld [vmem:[%s185 + $0x190] sm:$0xff]
      %v263 = vld [vmem:[%s185 + $0x198] sm:$0xff]
      %v264 = vld [vmem:[%s185 + $0x1a0] sm:$0xff]
      %v265 = vld [vmem:[%s185 + $0x1a8] sm:$0xff]
      %v266 = vld [vmem:[%s185 + $0x1b0] sm:$0xff]
      %v267 = vld [vmem:[%s185 + $0x1b8] sm:$0xff]
      %v268 = vld [vmem:[%s185 + $0x1c0] sm:$0xff]
      %v269 = vld [vmem:[%s185 + $0x1c8] sm:$0xff]
      %v270 = vld [vmem:[%s185 + $0x1d0] sm:$0xff]
      %v271 = vld [vmem:[%s185 + $0x1d8] sm:$0xff]
      %v272 = vld [vmem:[%s185 + $0x1e0] sm:$0xff]
      %v273 = vld [vmem:[%s185 + $0x1e8] sm:$0xff]
      %v274 = vld [vmem:[%s185 + $0x1f0] sm:$0xff]
      %v275 = vld [vmem:[%s185 + $0x1f8] sm:$0xff]
      %v276 = vld [vmem:[%s192] sm:$0xff]
      %v277 = vld [vmem:[%s192 + $0x8] sm:$0xff]
      %v278 = vld [vmem:[%s192 + $0x10] sm:$0xff]
      %v279 = vld [vmem:[%s192 + $0x18] sm:$0xff]
      %v280 = vld [vmem:[%s192 + $0x20] sm:$0xff]
      %v281 = vld [vmem:[%s192 + $0x28] sm:$0xff]
      %v282 = vld [vmem:[%s192 + $0x30] sm:$0xff]
      %v283 = vld [vmem:[%s192 + $0x38] sm:$0xff]
      %v284 = vld [vmem:[%s192 + $0x40] sm:$0xff]
      %v285 = vld [vmem:[%s192 + $0x48] sm:$0xff]
      %v286 = vld [vmem:[%s192 + $0x50] sm:$0xff]
      %v287 = vld [vmem:[%s192 + $0x58] sm:$0xff]
      %v288 = vld [vmem:[%s192 + $0x60] sm:$0xff]
      %v289 = vld [vmem:[%s192 + $0x68] sm:$0xff]
      %v290 = vld [vmem:[%s192 + $0x70] sm:$0xff]
      %v291 = vld [vmem:[%s192 + $0x78] sm:$0xff]
      %v292 = vld [vmem:[%s192 + $0x80] sm:$0xff]
      %v293 = vld [vmem:[%s192 + $0x88] sm:$0xff]
      %v294 = vld [vmem:[%s192 + $0x90] sm:$0xff]
      %v295 = vld [vmem:[%s192 + $0x98] sm:$0xff]
      %v296 = vld [vmem:[%s192 + $0xa0] sm:$0xff]
      %v297 = vld [vmem:[%s192 + $0xa8] sm:$0xff]
      %v298 = vld [vmem:[%s192 + $0xb0] sm:$0xff]
      %v299 = vld [vmem:[%s192 + $0xb8] sm:$0xff]
      %v300 = vld [vmem:[%s192 + $0xc0] sm:$0xff]
      %v301 = vld [vmem:[%s192 + $0xc8] sm:$0xff]
      %v302 = vld [vmem:[%s192 + $0xd0] sm:$0xff]
      %v303 = vld [vmem:[%s192 + $0xd8] sm:$0xff]
      %v304 = vld [vmem:[%s192 + $0xe0] sm:$0xff]
      %v305 = vld [vmem:[%s192 + $0xe8] sm:$0xff]
      %v306 = vld [vmem:[%s192 + $0xf0] sm:$0xff]
      %v307 = vld [vmem:[%s192 + $0xf8] sm:$0xff]
      %v308 = vld [vmem:[%s192 + $0x100] sm:$0xff]
      %v309 = vld [vmem:[%s192 + $0x108] sm:$0xff]
      %v310 = vld [vmem:[%s192 + $0x110] sm:$0xff]
      %v311 = vld [vmem:[%s192 + $0x118] sm:$0xff]
      %v312 = vld [vmem:[%s192 + $0x120] sm:$0xff]
      %v313 = vld [vmem:[%s192 + $0x128] sm:$0xff]
      %v314 = vld [vmem:[%s192 + $0x130] sm:$0xff]
      %v315 = vld [vmem:[%s192 + $0x138] sm:$0xff]
      %v316 = vld [vmem:[%s192 + $0x140] sm:$0xff]
      %v317 = vld [vmem:[%s192 + $0x148] sm:$0xff]
      %v318 = vld [vmem:[%s192 + $0x150] sm:$0xff]
      %v319 = vld [vmem:[%s192 + $0x158] sm:$0xff]
      %v320 = vld [vmem:[%s192 + $0x160] sm:$0xff]
      %v321 = vld [vmem:[%s192 + $0x168] sm:$0xff]
      %v322 = vld [vmem:[%s192 + $0x170] sm:$0xff]
      %v323 = vld [vmem:[%s192 + $0x178] sm:$0xff]
      %v324 = vld [vmem:[%s192 + $0x180] sm:$0xff]
      %v325 = vld [vmem:[%s192 + $0x188] sm:$0xff]
      %v326 = vld [vmem:[%s192 + $0x190] sm:$0xff]
      %v327 = vld [vmem:[%s192 + $0x198] sm:$0xff]
      %v328 = vld [vmem:[%s192 + $0x1a0] sm:$0xff]
      %v329 = vld [vmem:[%s192 + $0x1a8] sm:$0xff]
      %v330 = vld [vmem:[%s192 + $0x1b0] sm:$0xff]
      %v331 = vld [vmem:[%s192 + $0x1b8] sm:$0xff]
      %v332 = vld [vmem:[%s192 + $0x1c0] sm:$0xff]
      %v333 = vld [vmem:[%s192 + $0x1c8] sm:$0xff]
      %v334 = vld [vmem:[%s192 + $0x1d0] sm:$0xff]
      %v335 = vld [vmem:[%s192 + $0x1d8] sm:$0xff]
      %v336 = vld [vmem:[%s192 + $0x1e0] sm:$0xff]
      %v337 = vld [vmem:[%s192 + $0x1e8] sm:$0xff]
      %v338 = vld [vmem:[%s192 + $0x1f0] sm:$0xff]
      %v339 = vld [vmem:[%s192 + $0x1f8] sm:$0xff]
      %v340 = vld [vmem:[%s192 + $0x200] sm:$0xff]
      %v341 = vld [vmem:[%s192 + $0x208] sm:$0xff]
      %v342 = vld [vmem:[%s192 + $0x210] sm:$0xff]
      %v343 = vld [vmem:[%s192 + $0x218] sm:$0xff]
      %v344 = vld [vmem:[%s192 + $0x220] sm:$0xff]
      %v345 = vld [vmem:[%s192 + $0x228] sm:$0xff]
      %v346 = vld [vmem:[%s192 + $0x230] sm:$0xff]
      %v347 = vld [vmem:[%s192 + $0x238] sm:$0xff]
      %v348 = vld [vmem:[%s192 + $0x240] sm:$0xff]
      %v349 = vld [vmem:[%s192 + $0x248] sm:$0xff]
      %v350 = vld [vmem:[%s192 + $0x250] sm:$0xff]
      %v351 = vld [vmem:[%s192 + $0x258] sm:$0xff]
      %v352 = vld [vmem:[%s192 + $0x260] sm:$0xff]
      %v353 = vld [vmem:[%s192 + $0x268] sm:$0xff]
      %v354 = vld [vmem:[%s192 + $0x270] sm:$0xff]
      %v355 = vld [vmem:[%s192 + $0x278] sm:$0xff]
      %v356 = vld [vmem:[%s192 + $0x280] sm:$0xff]
      %v357 = vld [vmem:[%s192 + $0x288] sm:$0xff]
      %v358 = vld [vmem:[%s192 + $0x290] sm:$0xff]
      %v359 = vld [vmem:[%s192 + $0x298] sm:$0xff]
      %v360 = vld [vmem:[%s192 + $0x2a0] sm:$0xff]
      %v361 = vld [vmem:[%s192 + $0x2a8] sm:$0xff]
      %v362 = vld [vmem:[%s192 + $0x2b0] sm:$0xff]
      %v363 = vld [vmem:[%s192 + $0x2b8] sm:$0xff]
      %v364 = vld [vmem:[%s192 + $0x2c0] sm:$0xff]
      %v365 = vld [vmem:[%s192 + $0x2c8] sm:$0xff]
      %v366 = vld [vmem:[%s192 + $0x2d0] sm:$0xff]
      %v367 = vld [vmem:[%s192 + $0x2d8] sm:$0xff]
      %v368 = vld [vmem:[%s192 + $0x2e0] sm:$0xff]
      %v369 = vld [vmem:[%s192 + $0x2e8] sm:$0xff]
      %v370 = vld [vmem:[%s192 + $0x2f0] sm:$0xff]
      %v371 = vld [vmem:[%s192 + $0x2f8] sm:$0xff]
      %v372 = vld [vmem:[%s192 + $0x300] sm:$0xff]
      %v373 = vld [vmem:[%s192 + $0x308] sm:$0xff]
      %v374 = vld [vmem:[%s192 + $0x310] sm:$0xff]
      %v375 = vld [vmem:[%s192 + $0x318] sm:$0xff]
      %v376 = vld [vmem:[%s192 + $0x320] sm:$0xff]
      %v377 = vld [vmem:[%s192 + $0x328] sm:$0xff]
      %v378 = vld [vmem:[%s192 + $0x330] sm:$0xff]
      %v379 = vld [vmem:[%s192 + $0x338] sm:$0xff]
      %v380 = vld [vmem:[%s192 + $0x340] sm:$0xff]
      %v381 = vld [vmem:[%s192 + $0x348] sm:$0xff]
      %v382 = vld [vmem:[%s192 + $0x350] sm:$0xff]
      %v383 = vld [vmem:[%s192 + $0x358] sm:$0xff]
      %v384 = vld [vmem:[%s192 + $0x360] sm:$0xff]
      %v385 = vld [vmem:[%s192 + $0x368] sm:$0xff]
      %v386 = vld [vmem:[%s192 + $0x370] sm:$0xff]
      %v387 = vld [vmem:[%s192 + $0x378] sm:$0xff]
      %v388 = vld [vmem:[%s192 + $0x380] sm:$0xff]
      %v389 = vld [vmem:[%s192 + $0x388] sm:$0xff]
      %v390 = vld [vmem:[%s192 + $0x390] sm:$0xff]
      %v391 = vld [vmem:[%s192 + $0x398] sm:$0xff]
      %v392 = vld [vmem:[%s192 + $0x3a0] sm:$0xff]
      %v393 = vld [vmem:[%s192 + $0x3a8] sm:$0xff]
      %v394 = vld [vmem:[%s192 + $0x3b0] sm:$0xff]
      %v395 = vld [vmem:[%s192 + $0x3b8] sm:$0xff]
      %v396 = vld [vmem:[%s192 + $0x3c0] sm:$0xff]
      %v397 = vld [vmem:[%s192 + $0x3c8] sm:$0xff]
      %v398 = vld [vmem:[%s192 + $0x3d0] sm:$0xff]
      %v399 = vld [vmem:[%s192 + $0x3d8] sm:$0xff]
      %v400 = vld [vmem:[%s192 + $0x3e0] sm:$0xff]
      %v401 = vld [vmem:[%s192 + $0x3e8] sm:$0xff]
      %v402 = vld [vmem:[%s192 + $0x3f0] sm:$0xff]
      %v403 = vld [vmem:[%s192 + $0x3f8] sm:$0xff]
      %v404 = vld [vmem:[%s192 + $0x400] sm:$0xff]
      %v405 = vld [vmem:[%s192 + $0x408] sm:$0xff]
      %v406 = vld [vmem:[%s192 + $0x410] sm:$0xff]
      %v407 = vld [vmem:[%s192 + $0x418] sm:$0xff]
      %v408 = vld [vmem:[%s192 + $0x420] sm:$0xff]
      %v409 = vld [vmem:[%s192 + $0x428] sm:$0xff]
      %v410 = vld [vmem:[%s192 + $0x430] sm:$0xff]
      %v411 = vld [vmem:[%s192 + $0x438] sm:$0xff]
      %v412 = vld [vmem:[%s192 + $0x440] sm:$0xff]
      %v413 = vld [vmem:[%s192 + $0x448] sm:$0xff]
      %v414 = vld [vmem:[%s192 + $0x450] sm:$0xff]
      %v415 = vld [vmem:[%s192 + $0x458] sm:$0xff]
      %v416 = vld [vmem:[%s192 + $0x460] sm:$0xff]
      %v417 = vld [vmem:[%s192 + $0x468] sm:$0xff]
      %v418 = vld [vmem:[%s192 + $0x470] sm:$0xff]
      %v419 = vld [vmem:[%s192 + $0x478] sm:$0xff]
      %v420 = vld [vmem:[%s192 + $0x480] sm:$0xff]
      %v421 = vld [vmem:[%s192 + $0x488] sm:$0xff]
      %v422 = vld [vmem:[%s192 + $0x490] sm:$0xff]
      %v423 = vld [vmem:[%s192 + $0x498] sm:$0xff]
      %v424 = vld [vmem:[%s192 + $0x4a0] sm:$0xff]
      %v425 = vld [vmem:[%s192 + $0x4a8] sm:$0xff]
      %v426 = vld [vmem:[%s192 + $0x4b0] sm:$0xff]
      %v427 = vld [vmem:[%s192 + $0x4b8] sm:$0xff]
      %v428 = vld [vmem:[%s192 + $0x4c0] sm:$0xff]
      %v429 = vld [vmem:[%s192 + $0x4c8] sm:$0xff]
      %v430 = vld [vmem:[%s192 + $0x4d0] sm:$0xff]
      %v431 = vld [vmem:[%s192 + $0x4d8] sm:$0xff]
      %v432 = vld [vmem:[%s192 + $0x4e0] sm:$0xff]
      %v433 = vld [vmem:[%s192 + $0x4e8] sm:$0xff]
      %v434 = vld [vmem:[%s192 + $0x4f0] sm:$0xff]
      %v435 = vld [vmem:[%s192 + $0x4f8] sm:$0xff]
      %v436 = vld [vmem:[%s192 + $0x500] sm:$0xff]
      %v437 = vld [vmem:[%s192 + $0x508] sm:$0xff]
      %v438 = vld [vmem:[%s192 + $0x510] sm:$0xff]
      %v439 = vld [vmem:[%s192 + $0x518] sm:$0xff]
      %v440 = vld [vmem:[%s192 + $0x520] sm:$0xff]
      %v441 = vld [vmem:[%s192 + $0x528] sm:$0xff]
      %v442 = vld [vmem:[%s192 + $0x530] sm:$0xff]
      %v443 = vld [vmem:[%s192 + $0x538] sm:$0xff]
      %v444 = vld [vmem:[%s192 + $0x540] sm:$0xff]
      %v445 = vld [vmem:[%s192 + $0x548] sm:$0xff]
      %v446 = vld [vmem:[%s192 + $0x550] sm:$0xff]
      %v447 = vld [vmem:[%s192 + $0x558] sm:$0xff]
      %v448 = vld [vmem:[%s192 + $0x560] sm:$0xff]
      %v449 = vld [vmem:[%s192 + $0x568] sm:$0xff]
      %v450 = vld [vmem:[%s192 + $0x570] sm:$0xff]
      %v451 = vld [vmem:[%s192 + $0x578] sm:$0xff]
      %v452 = vld [vmem:[%s192 + $0x580] sm:$0xff]
      %v453 = vld [vmem:[%s192 + $0x588] sm:$0xff]
      %v454 = vld [vmem:[%s192 + $0x590] sm:$0xff]
      %v455 = vld [vmem:[%s192 + $0x598] sm:$0xff]
      %v456 = vld [vmem:[%s192 + $0x5a0] sm:$0xff]
      %v457 = vld [vmem:[%s192 + $0x5a8] sm:$0xff]
      %v458 = vld [vmem:[%s192 + $0x5b0] sm:$0xff]
      %v459 = vld [vmem:[%s192 + $0x5b8] sm:$0xff]
      %v460 = vld [vmem:[%s192 + $0x5c0] sm:$0xff]
      %v461 = vld [vmem:[%s192 + $0x5c8] sm:$0xff]
      %v462 = vld [vmem:[%s192 + $0x5d0] sm:$0xff]
      %v463 = vld [vmem:[%s192 + $0x5d8] sm:$0xff]
      %v464 = vld [vmem:[%s192 + $0x5e0] sm:$0xff]
      %v465 = vld [vmem:[%s192 + $0x5e8] sm:$0xff]
      %v466 = vld [vmem:[%s192 + $0x5f0] sm:$0xff]
      %v467 = vld [vmem:[%s192 + $0x5f8] sm:$0xff]
      %v468 = vld [vmem:[%s192 + $0x600] sm:$0xff]
      %v469 = vld [vmem:[%s192 + $0x608] sm:$0xff]
      %v470 = vld [vmem:[%s192 + $0x610] sm:$0xff]
      %v471 = vld [vmem:[%s192 + $0x618] sm:$0xff]
      %v472 = vld [vmem:[%s192 + $0x620] sm:$0xff]
      %v473 = vld [vmem:[%s192 + $0x628] sm:$0xff]
      %v474 = vld [vmem:[%s192 + $0x630] sm:$0xff]
      %v475 = vld [vmem:[%s192 + $0x638] sm:$0xff]
      %v476 = vld [vmem:[%s192 + $0x640] sm:$0xff]
      %v477 = vld [vmem:[%s192 + $0x648] sm:$0xff]
      %v478 = vld [vmem:[%s192 + $0x650] sm:$0xff]
      %v479 = vld [vmem:[%s192 + $0x658] sm:$0xff]
      %v480 = vld [vmem:[%s192 + $0x660] sm:$0xff]
      %v481 = vld [vmem:[%s192 + $0x668] sm:$0xff]
      %v482 = vld [vmem:[%s192 + $0x670] sm:$0xff]
      %v483 = vld [vmem:[%s192 + $0x678] sm:$0xff]
      %v484 = vld [vmem:[%s192 + $0x680] sm:$0xff]
      %v485 = vld [vmem:[%s192 + $0x688] sm:$0xff]
      %v486 = vld [vmem:[%s192 + $0x690] sm:$0xff]
      %v487 = vld [vmem:[%s192 + $0x698] sm:$0xff]
      %v488 = vld [vmem:[%s192 + $0x6a0] sm:$0xff]
      %v489 = vld [vmem:[%s192 + $0x6a8] sm:$0xff]
      %v490 = vld [vmem:[%s192 + $0x6b0] sm:$0xff]
      %v491 = vld [vmem:[%s192 + $0x6b8] sm:$0xff]
      %v492 = vld [vmem:[%s192 + $0x6c0] sm:$0xff]
      %v493 = vld [vmem:[%s192 + $0x6c8] sm:$0xff]
      %v494 = vld [vmem:[%s192 + $0x6d0] sm:$0xff]
      %v495 = vld [vmem:[%s192 + $0x6d8] sm:$0xff]
      %v496 = vld [vmem:[%s192 + $0x6e0] sm:$0xff]
      %v497 = vld [vmem:[%s192 + $0x6e8] sm:$0xff]
      %v498 = vld [vmem:[%s192 + $0x6f0] sm:$0xff]
      %v499 = vld [vmem:[%s192 + $0x6f8] sm:$0xff]
      %v500 = vld [vmem:[%s192 + $0x700] sm:$0xff]
      %v501 = vld [vmem:[%s192 + $0x708] sm:$0xff]
      %v502 = vld [vmem:[%s192 + $0x710] sm:$0xff]
      %v503 = vld [vmem:[%s192 + $0x718] sm:$0xff]
      %v504 = vld [vmem:[%s192 + $0x720] sm:$0xff]
      %v505 = vld [vmem:[%s192 + $0x728] sm:$0xff]
      %v506 = vld [vmem:[%s192 + $0x730] sm:$0xff]
      %v507 = vld [vmem:[%s192 + $0x738] sm:$0xff]
      %v508 = vld [vmem:[%s192 + $0x740] sm:$0xff]
      %v509 = vld [vmem:[%s192 + $0x748] sm:$0xff]
      %v510 = vld [vmem:[%s192 + $0x750] sm:$0xff]
      %v511 = vld [vmem:[%s192 + $0x758] sm:$0xff]
      %v512 = vld [vmem:[%s192 + $0x760] sm:$0xff]
      %v513 = vld [vmem:[%s192 + $0x768] sm:$0xff]
      %v514 = vld [vmem:[%s192 + $0x770] sm:$0xff]
      %v515 = vld [vmem:[%s192 + $0x778] sm:$0xff]
      %v516 = vld [vmem:[%s192 + $0x780] sm:$0xff]
      %v517 = vld [vmem:[%s192 + $0x788] sm:$0xff]
      %v518 = vld [vmem:[%s192 + $0x790] sm:$0xff]
      %v519 = vld [vmem:[%s192 + $0x798] sm:$0xff]
      %v520 = vld [vmem:[%s192 + $0x7a0] sm:$0xff]
      %v521 = vld [vmem:[%s192 + $0x7a8] sm:$0xff]
      %v522 = vld [vmem:[%s192 + $0x7b0] sm:$0xff]
      %v523 = vld [vmem:[%s192 + $0x7b8] sm:$0xff]
      %v524 = vld [vmem:[%s192 + $0x7c0] sm:$0xff]
      %v525 = vld [vmem:[%s192 + $0x7c8] sm:$0xff]
      %v526 = vld [vmem:[%s192 + $0x7d0] sm:$0xff]
      %v527 = vld [vmem:[%s192 + $0x7d8] sm:$0xff]
      %v528 = vld [vmem:[%s192 + $0x7e0] sm:$0xff]
      %v529 = vld [vmem:[%s192 + $0x7e8] sm:$0xff]
      %v530 = vld [vmem:[%s192 + $0x7f0] sm:$0xff]
      %v531 = vld [vmem:[%s192 + $0x7f8] sm:$0xff]
      %532 = vmatpush.msra.mxu0 %v291
      %533 = vmatpush.msra.mxu0 %v290
      %534 = vmatpush.msra.mxu0 %v289
      %535 = vmatpush.msra.mxu0 %v288
      %536 = vmatpush.msra.mxu0 %v287
      %537 = vmatpush.msra.mxu0 %v286
      %538 = vmatpush.msra.mxu0 %v285
      %539 = vmatpush.msra.mxu0 %v284
      %540 = vmatpush.msra.mxu0 %v283
      %541 = vmatpush.msra.mxu0 %v282
      %542 = vmatpush.msra.mxu0 %v281
      %543 = vmatpush.msra.mxu0 %v280
      %544 = vmatpush.msra.mxu0 %v279
      %545 = vmatpush.msra.mxu0 %v278
      %546 = vmatpush.msra.mxu0 %v277
      %547 = vmatpush.msra.mxu0 %v276
      %548 = vmatmul.f32.gmra.mxu0 %v212
      %v549 = vpop.f32.mrf.mxu0
      %v550 = vadd.f32 0.0, %v549
      %551 = vmatmul.f32.gmra.mxu0 %v228
      %v552 = vpop.f32.mrf.mxu0
      %v553 = vadd.f32 0.0, %v552
      %554 = vmatmul.f32.gmra.mxu0 %v244
      %v555 = vpop.f32.mrf.mxu0
      %v556 = vadd.f32 0.0, %v555
      %557 = vmatmul.f32.gmra.mxu0 %v260
      %v558 = vpop.f32.mrf.mxu0
      %v559 = vadd.f32 0.0, %v558
      %560 = vdwg.mxu0
      %561 = vmatpush.msra.mxu0 %v307
      %562 = vmatpush.msra.mxu0 %v306
      %563 = vmatpush.msra.mxu0 %v305
      %564 = vmatpush.msra.mxu0 %v304
      %565 = vmatpush.msra.mxu0 %v303
      %566 = vmatpush.msra.mxu0 %v302
      %567 = vmatpush.msra.mxu0 %v301
      %568 = vmatpush.msra.mxu0 %v300
      %569 = vmatpush.msra.mxu0 %v299
      %570 = vmatpush.msra.mxu0 %v298
      %571 = vmatpush.msra.mxu0 %v297
      %572 = vmatpush.msra.mxu0 %v296
      %573 = vmatpush.msra.mxu0 %v295
      %574 = vmatpush.msra.mxu0 %v294
      %575 = vmatpush.msra.mxu0 %v293
      %576 = vmatpush.msra.mxu0 %v292
      %577 = vmatmul.f32.gmra.mxu0 %v213
      %v578 = vpop.f32.mrf.mxu0
      %v579 = vadd.f32 %v550, %v578
      %580 = vmatmul.f32.gmra.mxu0 %v229
      %v581 = vpop.f32.mrf.mxu0
      %v582 = vadd.f32 %v553, %v581
      %583 = vmatmul.f32.gmra.mxu0 %v245
      %v584 = vpop.f32.mrf.mxu0
      %v585 = vadd.f32 %v556, %v584
      %586 = vmatmul.f32.gmra.mxu0 %v261
      %v587 = vpop.f32.mrf.mxu0
      %v588 = vadd.f32 %v559, %v587
      %589 = vdwg.mxu0
      %590 = vmatpush.msra.mxu0 %v323
      %591 = vmatpush.msra.mxu0 %v322
      %592 = vmatpush.msra.mxu0 %v321
      %593 = vmatpush.msra.mxu0 %v320
      %594 = vmatpush.msra.mxu0 %v319
      %595 = vmatpush.msra.mxu0 %v318
      %596 = vmatpush.msra.mxu0 %v317
      %597 = vmatpush.msra.mxu0 %v316
      %598 = vmatpush.msra.mxu0 %v315
      %599 = vmatpush.msra.mxu0 %v314
      %600 = vmatpush.msra.mxu0 %v313
      %601 = vmatpush.msra.mxu0 %v312
      %602 = vmatpush.msra.mxu0 %v311
      %603 = vmatpush.msra.mxu0 %v310
      %604 = vmatpush.msra.mxu0 %v309
      %605 = vmatpush.msra.mxu0 %v308
      %606 = vmatmul.f32.gmra.mxu0 %v214
      %v607 = vpop.f32.mrf.mxu0
      %v608 = vadd.f32 %v579, %v607
      %609 = vmatmul.f32.gmra.mxu0 %v230
      %v610 = vpop.f32.mrf.mxu0
      %v611 = vadd.f32 %v582, %v610
      %612 = vmatmul.f32.gmra.mxu0 %v246
      %v613 = vpop.f32.mrf.mxu0
      %v614 = vadd.f32 %v585, %v613
      %615 = vmatmul.f32.gmra.mxu0 %v262
      %v616 = vpop.f32.mrf.mxu0
      %v617 = vadd.f32 %v588, %v616
      %618 = vdwg.mxu0
      %619 = vmatpush.msra.mxu0 %v339
      %620 = vmatpush.msra.mxu0 %v338
      %621 = vmatpush.msra.mxu0 %v337
      %622 = vmatpush.msra.mxu0 %v336
      %623 = vmatpush.msra.mxu0 %v335
      %624 = vmatpush.msra.mxu0 %v334
      %625 = vmatpush.msra.mxu0 %v333
      %626 = vmatpush.msra.mxu0 %v332
      %627 = vmatpush.msra.mxu0 %v331
      %628 = vmatpush.msra.mxu0 %v330
      %629 = vmatpush.msra.mxu0 %v329
      %630 = vmatpush.msra.mxu0 %v328
      %631 = vmatpush.msra.mxu0 %v327
      %632 = vmatpush.msra.mxu0 %v326
      %633 = vmatpush.msra.mxu0 %v325
      %634 = vmatpush.msra.mxu0 %v324
      %635 = vmatmul.f32.gmra.mxu0 %v215
      %v636 = vpop.f32.mrf.mxu0
      %v637 = vadd.f32 %v608, %v636
      %638 = vmatmul.f32.gmra.mxu0 %v231
      %v639 = vpop.f32.mrf.mxu0
      %v640 = vadd.f32 %v611, %v639
      %641 = vmatmul.f32.gmra.mxu0 %v247
      %v642 = vpop.f32.mrf.mxu0
      %v643 = vadd.f32 %v614, %v642
      %644 = vmatmul.f32.gmra.mxu0 %v263
      %v645 = vpop.f32.mrf.mxu0
      %v646 = vadd.f32 %v617, %v645
      %647 = vdwg.mxu0
      %648 = vmatpush.msra.mxu0 %v355
      %649 = vmatpush.msra.mxu0 %v354
      %650 = vmatpush.msra.mxu0 %v353
      %651 = vmatpush.msra.mxu0 %v352
      %652 = vmatpush.msra.mxu0 %v351
      %653 = vmatpush.msra.mxu0 %v350
      %654 = vmatpush.msra.mxu0 %v349
      %655 = vmatpush.msra.mxu0 %v348
      %656 = vmatpush.msra.mxu0 %v347
      %657 = vmatpush.msra.mxu0 %v346
      %658 = vmatpush.msra.mxu0 %v345
      %659 = vmatpush.msra.mxu0 %v344
      %660 = vmatpush.msra.mxu0 %v343
      %661 = vmatpush.msra.mxu0 %v342
      %662 = vmatpush.msra.mxu0 %v341
      %663 = vmatpush.msra.mxu0 %v340
      %664 = vmatmul.f32.gmra.mxu0 %v216
      %v665 = vpop.f32.mrf.mxu0
      %v666 = vadd.f32 %v637, %v665
      %667 = vmatmul.f32.gmra.mxu0 %v232
      %v668 = vpop.f32.mrf.mxu0
      %v669 = vadd.f32 %v640, %v668
      %670 = vmatmul.f32.gmra.mxu0 %v248
      %v671 = vpop.f32.mrf.mxu0
      %v672 = vadd.f32 %v643, %v671
      %673 = vmatmul.f32.gmra.mxu0 %v264
      %v674 = vpop.f32.mrf.mxu0
      %v675 = vadd.f32 %v646, %v674
      %676 = vdwg.mxu0
      %677 = vmatpush.msra.mxu0 %v371
      %678 = vmatpush.msra.mxu0 %v370
      %679 = vmatpush.msra.mxu0 %v369
      %680 = vmatpush.msra.mxu0 %v368
      %681 = vmatpush.msra.mxu0 %v367
      %682 = vmatpush.msra.mxu0 %v366
      %683 = vmatpush.msra.mxu0 %v365
      %684 = vmatpush.msra.mxu0 %v364
      %685 = vmatpush.msra.mxu0 %v363
      %686 = vmatpush.msra.mxu0 %v362
      %687 = vmatpush.msra.mxu0 %v361
      %688 = vmatpush.msra.mxu0 %v360
      %689 = vmatpush.msra.mxu0 %v359
      %690 = vmatpush.msra.mxu0 %v358
      %691 = vmatpush.msra.mxu0 %v357
      %692 = vmatpush.msra.mxu0 %v356
      %693 = vmatmul.f32.gmra.mxu0 %v217
      %v694 = vpop.f32.mrf.mxu0
      %v695 = vadd.f32 %v666, %v694
      %696 = vmatmul.f32.gmra.mxu0 %v233
      %v697 = vpop.f32.mrf.mxu0
      %v698 = vadd.f32 %v669, %v697
      %699 = vmatmul.f32.gmra.mxu0 %v249
      %v700 = vpop.f32.mrf.mxu0
      %v701 = vadd.f32 %v672, %v700
      %702 = vmatmul.f32.gmra.mxu0 %v265
      %v703 = vpop.f32.mrf.mxu0
      %v704 = vadd.f32 %v675, %v703
      %705 = vdwg.mxu0
      %706 = vmatpush.msra.mxu0 %v387
      %707 = vmatpush.msra.mxu0 %v386
      %708 = vmatpush.msra.mxu0 %v385
      %709 = vmatpush.msra.mxu0 %v384
      %710 = vmatpush.msra.mxu0 %v383
      %711 = vmatpush.msra.mxu0 %v382
      %712 = vmatpush.msra.mxu0 %v381
      %713 = vmatpush.msra.mxu0 %v380
      %714 = vmatpush.msra.mxu0 %v379
      %715 = vmatpush.msra.mxu0 %v378
      %716 = vmatpush.msra.mxu0 %v377
      %717 = vmatpush.msra.mxu0 %v376
      %718 = vmatpush.msra.mxu0 %v375
      %719 = vmatpush.msra.mxu0 %v374
      %720 = vmatpush.msra.mxu0 %v373
      %721 = vmatpush.msra.mxu0 %v372
      %722 = vmatmul.f32.gmra.mxu0 %v218
      %v723 = vpop.f32.mrf.mxu0
      %v724 = vadd.f32 %v695, %v723
      %725 = vmatmul.f32.gmra.mxu0 %v234
      %v726 = vpop.f32.mrf.mxu0
      %v727 = vadd.f32 %v698, %v726
      %728 = vmatmul.f32.gmra.mxu0 %v250
      %v729 = vpop.f32.mrf.mxu0
      %v730 = vadd.f32 %v701, %v729
      %731 = vmatmul.f32.gmra.mxu0 %v266
      %v732 = vpop.f32.mrf.mxu0
      %v733 = vadd.f32 %v704, %v732
      %734 = vdwg.mxu0
      %735 = vmatpush.msra.mxu0 %v403
      %736 = vmatpush.msra.mxu0 %v402
      %737 = vmatpush.msra.mxu0 %v401
      %738 = vmatpush.msra.mxu0 %v400
      %739 = vmatpush.msra.mxu0 %v399
      %740 = vmatpush.msra.mxu0 %v398
      %741 = vmatpush.msra.mxu0 %v397
      %742 = vmatpush.msra.mxu0 %v396
      %743 = vmatpush.msra.mxu0 %v395
      %744 = vmatpush.msra.mxu0 %v394
      %745 = vmatpush.msra.mxu0 %v393
      %746 = vmatpush.msra.mxu0 %v392
      %747 = vmatpush.msra.mxu0 %v391
      %748 = vmatpush.msra.mxu0 %v390
      %749 = vmatpush.msra.mxu0 %v389
      %750 = vmatpush.msra.mxu0 %v388
      %751 = vmatmul.f32.gmra.mxu0 %v219
      %v752 = vpop.f32.mrf.mxu0
      %v753 = vadd.f32 %v724, %v752
      %754 = vmatmul.f32.gmra.mxu0 %v235
      %v755 = vpop.f32.mrf.mxu0
      %v756 = vadd.f32 %v727, %v755
      %757 = vmatmul.f32.gmra.mxu0 %v251
      %v758 = vpop.f32.mrf.mxu0
      %v759 = vadd.f32 %v730, %v758
      %760 = vmatmul.f32.gmra.mxu0 %v267
      %v761 = vpop.f32.mrf.mxu0
      %v762 = vadd.f32 %v733, %v761
      %763 = vdwg.mxu0
      %764 = vmatpush.msra.mxu0 %v419
      %765 = vmatpush.msra.mxu0 %v418
      %766 = vmatpush.msra.mxu0 %v417
      %767 = vmatpush.msra.mxu0 %v416
      %768 = vmatpush.msra.mxu0 %v415
      %769 = vmatpush.msra.mxu0 %v414
      %770 = vmatpush.msra.mxu0 %v413
      %771 = vmatpush.msra.mxu0 %v412
      %772 = vmatpush.msra.mxu0 %v411
      %773 = vmatpush.msra.mxu0 %v410
      %774 = vmatpush.msra.mxu0 %v409
      %775 = vmatpush.msra.mxu0 %v408
      %776 = vmatpush.msra.mxu0 %v407
      %777 = vmatpush.msra.mxu0 %v406
      %778 = vmatpush.msra.mxu0 %v405
      %779 = vmatpush.msra.mxu0 %v404
      %780 = vmatmul.f32.gmra.mxu0 %v220
      %v781 = vpop.f32.mrf.mxu0
      %v782 = vadd.f32 %v753, %v781
      %783 = vmatmul.f32.gmra.mxu0 %v236
      %v784 = vpop.f32.mrf.mxu0
      %v785 = vadd.f32 %v756, %v784
      %786 = vmatmul.f32.gmra.mxu0 %v252
      %v787 = vpop.f32.mrf.mxu0
      %v788 = vadd.f32 %v759, %v787
      %789 = vmatmul.f32.gmra.mxu0 %v268
      %v790 = vpop.f32.mrf.mxu0
      %v791 = vadd.f32 %v762, %v790
      %792 = vdwg.mxu0
      %793 = vmatpush.msra.mxu0 %v435
      %794 = vmatpush.msra.mxu0 %v434
      %795 = vmatpush.msra.mxu0 %v433
      %796 = vmatpush.msra.mxu0 %v432
      %797 = vmatpush.msra.mxu0 %v431
      %798 = vmatpush.msra.mxu0 %v430
      %799 = vmatpush.msra.mxu0 %v429
      %800 = vmatpush.msra.mxu0 %v428
      %801 = vmatpush.msra.mxu0 %v427
      %802 = vmatpush.msra.mxu0 %v426
      %803 = vmatpush.msra.mxu0 %v425
      %804 = vmatpush.msra.mxu0 %v424
      %805 = vmatpush.msra.mxu0 %v423
      %806 = vmatpush.msra.mxu0 %v422
      %807 = vmatpush.msra.mxu0 %v421
      %808 = vmatpush.msra.mxu0 %v420
      %809 = vmatmul.f32.gmra.mxu0 %v221
      %v810 = vpop.f32.mrf.mxu0
      %v811 = vadd.f32 %v782, %v810
      %812 = vmatmul.f32.gmra.mxu0 %v237
      %v813 = vpop.f32.mrf.mxu0
      %v814 = vadd.f32 %v785, %v813
      %815 = vmatmul.f32.gmra.mxu0 %v253
      %v816 = vpop.f32.mrf.mxu0
      %v817 = vadd.f32 %v788, %v816
      %818 = vmatmul.f32.gmra.mxu0 %v269
      %v819 = vpop.f32.mrf.mxu0
      %v820 = vadd.f32 %v791, %v819
      %821 = vdwg.mxu0
      %822 = vmatpush.msra.mxu0 %v451
      %823 = vmatpush.msra.mxu0 %v450
      %824 = vmatpush.msra.mxu0 %v449
      %825 = vmatpush.msra.mxu0 %v448
      %826 = vmatpush.msra.mxu0 %v447
      %827 = vmatpush.msra.mxu0 %v446
      %828 = vmatpush.msra.mxu0 %v445
      %829 = vmatpush.msra.mxu0 %v444
      %830 = vmatpush.msra.mxu0 %v443
      %831 = vmatpush.msra.mxu0 %v442
      %832 = vmatpush.msra.mxu0 %v441
      %833 = vmatpush.msra.mxu0 %v440
      %834 = vmatpush.msra.mxu0 %v439
      %835 = vmatpush.msra.mxu0 %v438
      %836 = vmatpush.msra.mxu0 %v437
      %837 = vmatpush.msra.mxu0 %v436
      %838 = vmatmul.f32.gmra.mxu0 %v222
      %v839 = vpop.f32.mrf.mxu0
      %v840 = vadd.f32 %v811, %v839
      %841 = vmatmul.f32.gmra.mxu0 %v238
      %v842 = vpop.f32.mrf.mxu0
      %v843 = vadd.f32 %v814, %v842
      %844 = vmatmul.f32.gmra.mxu0 %v254
      %v845 = vpop.f32.mrf.mxu0
      %v846 = vadd.f32 %v817, %v845
      %847 = vmatmul.f32.gmra.mxu0 %v270
      %v848 = vpop.f32.mrf.mxu0
      %v849 = vadd.f32 %v820, %v848
      %850 = vdwg.mxu0
      %851 = vmatpush.msra.mxu0 %v467
      %852 = vmatpush.msra.mxu0 %v466
      %853 = vmatpush.msra.mxu0 %v465
      %854 = vmatpush.msra.mxu0 %v464
      %855 = vmatpush.msra.mxu0 %v463
      %856 = vmatpush.msra.mxu0 %v462
      %857 = vmatpush.msra.mxu0 %v461
      %858 = vmatpush.msra.mxu0 %v460
      %859 = vmatpush.msra.mxu0 %v459
      %860 = vmatpush.msra.mxu0 %v458
      %861 = vmatpush.msra.mxu0 %v457
      %862 = vmatpush.msra.mxu0 %v456
      %863 = vmatpush.msra.mxu0 %v455
      %864 = vmatpush.msra.mxu0 %v454
      %865 = vmatpush.msra.mxu0 %v453
      %866 = vmatpush.msra.mxu0 %v452
      %867 = vmatmul.f32.gmra.mxu0 %v223
      %v868 = vpop.f32.mrf.mxu0
      %v869 = vadd.f32 %v840, %v868
      %870 = vmatmul.f32.gmra.mxu0 %v239
      %v871 = vpop.f32.mrf.mxu0
      %v872 = vadd.f32 %v843, %v871
      %873 = vmatmul.f32.gmra.mxu0 %v255
      %v874 = vpop.f32.mrf.mxu0
      %v875 = vadd.f32 %v846, %v874
      %876 = vmatmul.f32.gmra.mxu0 %v271
      %v877 = vpop.f32.mrf.mxu0
      %v878 = vadd.f32 %v849, %v877
      %879 = vdwg.mxu0
      %880 = vmatpush.msra.mxu0 %v483
      %881 = vmatpush.msra.mxu0 %v482
      %882 = vmatpush.msra.mxu0 %v481
      %883 = vmatpush.msra.mxu0 %v480
      %884 = vmatpush.msra.mxu0 %v479
      %885 = vmatpush.msra.mxu0 %v478
      %886 = vmatpush.msra.mxu0 %v477
      %887 = vmatpush.msra.mxu0 %v476
      %888 = vmatpush.msra.mxu0 %v475
      %889 = vmatpush.msra.mxu0 %v474
      %890 = vmatpush.msra.mxu0 %v473
      %891 = vmatpush.msra.mxu0 %v472
      %892 = vmatpush.msra.mxu0 %v471
      %893 = vmatpush.msra.mxu0 %v470
      %894 = vmatpush.msra.mxu0 %v469
      %895 = vmatpush.msra.mxu0 %v468
      %896 = vmatmul.f32.gmra.mxu0 %v224
      %v897 = vpop.f32.mrf.mxu0
      %v898 = vadd.f32 %v869, %v897
      %899 = vmatmul.f32.gmra.mxu0 %v240
      %v900 = vpop.f32.mrf.mxu0
      %v901 = vadd.f32 %v872, %v900
      %902 = vmatmul.f32.gmra.mxu0 %v256
      %v903 = vpop.f32.mrf.mxu0
      %v904 = vadd.f32 %v875, %v903
      %905 = vmatmul.f32.gmra.mxu0 %v272
      %v906 = vpop.f32.mrf.mxu0
      %v907 = vadd.f32 %v878, %v906
      %908 = vdwg.mxu0
      %909 = vmatpush.msra.mxu0 %v499
      %910 = vmatpush.msra.mxu0 %v498
      %911 = vmatpush.msra.mxu0 %v497
      %912 = vmatpush.msra.mxu0 %v496
      %913 = vmatpush.msra.mxu0 %v495
      %914 = vmatpush.msra.mxu0 %v494
      %915 = vmatpush.msra.mxu0 %v493
      %916 = vmatpush.msra.mxu0 %v492
      %917 = vmatpush.msra.mxu0 %v491
      %918 = vmatpush.msra.mxu0 %v490
      %919 = vmatpush.msra.mxu0 %v489
      %920 = vmatpush.msra.mxu0 %v488
      %921 = vmatpush.msra.mxu0 %v487
      %922 = vmatpush.msra.mxu0 %v486
      %923 = vmatpush.msra.mxu0 %v485
      %924 = vmatpush.msra.mxu0 %v484
      %925 = vmatmul.f32.gmra.mxu0 %v225
      %v926 = vpop.f32.mrf.mxu0
      %v927 = vadd.f32 %v898, %v926
      %928 = vmatmul.f32.gmra.mxu0 %v241
      %v929 = vpop.f32.mrf.mxu0
      %v930 = vadd.f32 %v901, %v929
      %931 = vmatmul.f32.gmra.mxu0 %v257
      %v932 = vpop.f32.mrf.mxu0
      %v933 = vadd.f32 %v904, %v932
      %934 = vmatmul.f32.gmra.mxu0 %v273
      %v935 = vpop.f32.mrf.mxu0
      %v936 = vadd.f32 %v907, %v935
      %937 = vdwg.mxu0
      %938 = vmatpush.msra.mxu0 %v515
      %939 = vmatpush.msra.mxu0 %v514
      %940 = vmatpush.msra.mxu0 %v513
      %941 = vmatpush.msra.mxu0 %v512
      %942 = vmatpush.msra.mxu0 %v511
      %943 = vmatpush.msra.mxu0 %v510
      %944 = vmatpush.msra.mxu0 %v509
      %945 = vmatpush.msra.mxu0 %v508
      %946 = vmatpush.msra.mxu0 %v507
      %947 = vmatpush.msra.mxu0 %v506
      %948 = vmatpush.msra.mxu0 %v505
      %949 = vmatpush.msra.mxu0 %v504
      %950 = vmatpush.msra.mxu0 %v503
      %951 = vmatpush.msra.mxu0 %v502
      %952 = vmatpush.msra.mxu0 %v501
      %953 = vmatpush.msra.mxu0 %v500
      %954 = vmatmul.f32.gmra.mxu0 %v226
      %v955 = vpop.f32.mrf.mxu0
      %v956 = vadd.f32 %v927, %v955
      %957 = vmatmul.f32.gmra.mxu0 %v242
      %v958 = vpop.f32.mrf.mxu0
      %v959 = vadd.f32 %v930, %v958
      %960 = vmatmul.f32.gmra.mxu0 %v258
      %v961 = vpop.f32.mrf.mxu0
      %v962 = vadd.f32 %v933, %v961
      %963 = vmatmul.f32.gmra.mxu0 %v274
      %v964 = vpop.f32.mrf.mxu0
      %v965 = vadd.f32 %v936, %v964
      %966 = vdwg.mxu0
      %967 = vmatpush.msra.mxu0 %v531
      %968 = vmatpush.msra.mxu0 %v530
      %969 = vmatpush.msra.mxu0 %v529
      %970 = vmatpush.msra.mxu0 %v528
      %971 = vmatpush.msra.mxu0 %v527
      %972 = vmatpush.msra.mxu0 %v526
      %973 = vmatpush.msra.mxu0 %v525
      %974 = vmatpush.msra.mxu0 %v524
      %975 = vmatpush.msra.mxu0 %v523
      %976 = vmatpush.msra.mxu0 %v522
      %977 = vmatpush.msra.mxu0 %v521
      %978 = vmatpush.msra.mxu0 %v520
      %979 = vmatpush.msra.mxu0 %v519
      %980 = vmatpush.msra.mxu0 %v518
      %981 = vmatpush.msra.mxu0 %v517
      %982 = vmatpush.msra.mxu0 %v516
      %983 = vmatmul.f32.gmra.mxu0 %v227
      %v984 = vpop.f32.mrf.mxu0
      %v985 = vadd.f32 %v956, %v984
      %986 = vmatmul.f32.gmra.mxu0 %v243
      %v987 = vpop.f32.mrf.mxu0
      %v988 = vadd.f32 %v959, %v987
      %989 = vmatmul.f32.gmra.mxu0 %v259
      %v990 = vpop.f32.mrf.mxu0
      %v991 = vadd.f32 %v962, %v990
      %992 = vmatmul.f32.gmra.mxu0 %v275
      %v993 = vpop.f32.mrf.mxu0
      %v994 = vadd.f32 %v965, %v993
      %995 = vdwg.mxu0
      %v996 = vadd.f32 %v208, %v985
      %v997 = vadd.f32 %v209, %v988
      %v998 = vadd.f32 %v210, %v991
      %v999 = vadd.f32 %v211, %v994
      %1000 = vst [vmem:[#allocation2] sm:$0xff] %v996
      %1001 = vst [vmem:[#allocation2 + $0x8] sm:$0xff] %v997
      %1002 = vst [vmem:[#allocation2 + $0x10] sm:$0xff] %v998
      %1003 = vst [vmem:[#allocation2 + $0x18] sm:$0xff] %v999
      // Predicated region
      $region33: #{custom_avg_pool3d.1} parent=27 // pred_check
        %p1004 = pneg %p200
      $region34: #{custom_avg_pool3d.1} parent=27 // pred_check_branch
        %1006 = sbr.rel (%p1004) target = $region36
      $region35: #{custom_avg_pool3d.1} parent=27 // pred_region
        %v1007 = vld [vmem:[#allocation2] sm:$0xff]
        %v1008 = vld [vmem:[#allocation2 + $0x8] sm:$0xff]
        %v1009 = vld [vmem:[#allocation2 + $0x10] sm:$0xff]
        %v1010 = vld [vmem:[#allocation2 + $0x18] sm:$0xff]
        %1011 = vst [vmem:[%s198] sm:$0xff] %v1007
        %1012 = vst [vmem:[%s198 + $0x8] sm:$0xff] %v1008
        %1013 = vst [vmem:[%s198 + $0x10] sm:$0xff] %v1009
        %1014 = vst [vmem:[%s198 + $0x18] sm:$0xff] %v1010
      $region36: #{custom_avg_pool3d.1} parent=27 // pred_fallthru
        _
      %s1015 = smul.u32 4, %s17
      %p1016 = scmp.lt.s32.totalorder %s1015, 7
      %s1017 = scalar_select %p1016, %s1015, 7
      %s1018 = smul.addr %s1017, 8
      %s1019 = scalar_lea.vmem %s2, %s1018
      // Predicated region
      $region37: #{custom_avg_pool3d.1} parent=27 // pred_check
        %p1020 = pneg %p97
      $region38: #{custom_avg_pool3d.1} parent=27 // pred_check_branch
        %1022 = sbr.rel (%p1020) target = $region40
      $region39: #{custom_avg_pool3d.1} parent=27 // pred_region
        %s1023 = smul.u32 4, %s17
      $region40: #{custom_avg_pool3d.1} parent=27 // pred_fallthru
        _
    $region28: #{custom_avg_pool3d.1} parent=5 // pred_fallthru
      _
    %p1024 = scmp.le.s32.totalorder 2, %s8
    // Predicated region
    $region41: #{custom_avg_pool3d.1} parent=5 // pred_check
      %p1025 = pneg %p1024
    $region42: #{custom_avg_pool3d.1} parent=5 // pred_check_branch
      %1027 = sbr.rel (%p1025) target = $region44
    $region43: #{custom_avg_pool3d.1} parent=5 // pred_region
      %s1028 = ssub.s32 %s8, 2
      // Predicated region
      $region45: #{custom_avg_pool3d.1} parent=43 // pred_check
        %p1029 = pneg %p103
      $region46: #{custom_avg_pool3d.1} parent=43 // pred_check_branch
        %1031 = sbr.rel (%p1029) target = $region48
      $region47: #{custom_avg_pool3d.1} parent=43 // pred_region
        %s1032 = smul.u32 4, %s19
        %p1033 = scmp.lt.s32.totalorder %s1032, 7
        %s1034 = scalar_select %p1033, %s1032, 7
        %s1035 = smul.addr %s1034, 8
        %s1036 = scalar_lea.vmem %s2, %s1035
      $region48: #{custom_avg_pool3d.1} parent=43 // pred_fallthru
        _
    $region44: #{custom_avg_pool3d.1} parent=5 // pred_fallthru
      _
  $region6: #{custom_avg_pool3d.1} parent=0 // loop_footer
    %s12 = sadd.s32 1, %s8
  $region7: #{custom_avg_pool3d.1} parent=0 // loop_footer_branch
    %7 = sbr.rel target = $region3
  $region8: #{custom_avg_pool3d.1} parent=0 // loop_exit
    _

</llo_original>
